<compile_context>
chip_gen: v7x
topology: tpu7x:2x2x1
jax: 0.10.0
libtpu: 0.0.40
codegen_flags: <defaults>
</compile_context>

<pallas_src>
import jax
import jax.numpy as jnp
from jax.experimental import pallas as pl
from jax.experimental.pallas import tpu as pltpu


def mlp_kernel(x_ref,
               w1_ref, b1_ref,
               w2_ref, b2_ref,
               w3_ref, b3_ref,
               w45_ref, b45_ref,
               o_ref):
    """Fused 5-layer MLP forward for one batch tile (dropout = identity)."""
    mm_dtype = w1_ref.dtype  # bf16 (or f32) matmul-input dtype

    # fc1 + ReLU.  x arrives f32; the bf16 cast runs on the VPU under MXU work
    # instead of costing an extra XLA pass over x in the wrapper.
    h = jnp.dot(x_ref[...].astype(mm_dtype), w1_ref[...],
                preferred_element_type=jnp.float32)
    h = jnp.maximum(h + b1_ref[...], 0.0)                      # f32 VPU

    # fc2 + ReLU
    h = jnp.dot(h.astype(mm_dtype), w2_ref[...],
                preferred_element_type=jnp.float32)
    h = jnp.maximum(h + b2_ref[...], 0.0)

    # fc3 + ReLU -> (tile, 128) f32
    h = jnp.dot(h.astype(mm_dtype), w3_ref[...],
                preferred_element_type=jnp.float32)
    h = jnp.maximum(h + b3_ref[...], 0.0)

    # fc4 o fc5 fused to a single 128->1 projection.  Work against h^T so the
    # result lands lane-major (batch in lanes) for a dense (1, tile) store;
    # multiply + sublane-reduce run on the VPU/XLU, keeping the MXU slot free.
    ht = jnp.transpose(h)                                       # (128, tile) f32
    y = jnp.sum(ht * w45_ref[...], axis=0, keepdims=True)       # (1, tile) f32
    o_ref[...] = (y + b45_ref[...]).astype(o_ref.dtype)[None]   # (1, 1, tile)


def _round_up(x, m):
    return ((x + m - 1) // m) * m


def _cdiv(a, b):
    return (a + b - 1) // b


def mlp_forward(x, params, *, batch_tile=1024, use_bf16=True):
    """x: (B, input_dim) f32.  params: [(w,b)]*5, w (in,out), b (1,out), f32."""
    assert batch_tile >= 8
    B, in_dim = x.shape
    (w1, b1), (w2, b2), (w3, b3), (w4, b4), (w5, b5) = params

    # Exact algebraic fusion of fc4 and fc5 (no nonlinearity between them).
    w45_col = w4 @ w5                       # (128, 1) f32, used on the VPU
    b45 = b4 @ w5 + b5                      # (1, 1) f32

    mm_dtype = jnp.bfloat16 if use_bf16 else jnp.float32
    w1m, w2m, w3m = (w.astype(mm_dtype) for w in (w1, w2, w3))

    # --- batch tiling --------------------------------------------------------
    #  * tile chosen to minimize padding (only /8 sublane granularity needed)
    #  * force >=2 grid steps once B >= 16 so the "parallel" axis has work for
    #    both v7x TensorCores (harmless no-op on 1-TC v5e/v6e)
    num_steps = _cdiv(B, batch_tile)
    if B >= 16:
        num_steps = max(num_steps, 2)
    tile = _round_up(_cdiv(B, num_steps), 8)
    num_steps = _cdiv(B, tile)
    b_pad = num_steps * tile
    x_p = x if b_pad == B else jnp.pad(x, ((0, b_pad - B), (0, 0)))
    # x stays f32 here; the bf16 cast happens inside the kernel.

    def resident(a):
        # Constant index map => fetched once; single-buffer to save VMEM.
        return pl.BlockSpec(a.shape, lambda i: (0, 0),
                            pipeline_mode=pl.Buffered(1))

    in_specs = [
        pl.BlockSpec((tile, in_dim), lambda i: (i, 0)),    # batch-tiled input
        resident(w1m), resident(b1),
        resident(w2m), resident(b2),
        resident(w3m), resident(b3),
        resident(w45_col), resident(b45),
    ]
    # Lane-dense output: one dense (1, tile) row per grid step (full-width
    # stores) instead of a masked (tile, 1) column; reshaped to (B, 1) below.
    out_specs = pl.BlockSpec((1, 1, tile), lambda i: (i, 0, 0))
    out_shape = jax.ShapeDtypeStruct((num_steps, 1, tile), jnp.float32)

    weight_bytes = int(sum(a.size * a.dtype.itemsize
                           for a in (w1m, b1, w2m, b2, w3m, b3, w45_col, b45)))
    act_bytes = tile * (512 + 256 + 128) * 6        # f32 temps + bf16 copies
    io_bytes = 2 * tile * (in_dim * 4 + 4)          # double-buffered x / out blocks
    vmem_limit = int(min(48 << 20,                  # stay inside v7x's 64 MiB
                         max(32 << 20,
                             weight_bytes + act_bytes + io_bytes + (8 << 20))))

    flops = 2 * b_pad * (in_dim * 512 + 512 * 256 + 256 * 128 + 128 * 1)
    bytes_accessed = int(x_p.size * x_p.dtype.itemsize + weight_bytes + b_pad * 4)

    out = pl.pallas_call(
        mlp_kernel,
        out_shape=out_shape,
        grid_spec=pltpu.PrefetchScalarGridSpec(
            num_scalar_prefetch=0,
            grid=(num_steps,),
            in_specs=in_specs,
            out_specs=out_specs,
        ),
        compiler_params=pltpu.CompilerParams(
            dimension_semantics=("parallel",),       # megacore / v7x 2-TC shard
            vmem_limit_bytes=vmem_limit,
        ),
        cost_estimate=pl.CostEstimate(
            flops=flops, transcendentals=0, bytes_accessed=bytes_accessed),
    )(x_p, w1m, b1, w2m, b2, w3m, b3, w45_col, b45)

    return out.reshape(-1)[:B].reshape(B, 1)


def init_params(key, input_dim):
    """PyTorch nn.Linear default init: U[-1/sqrt(fan_in), +1/sqrt(fan_in)]."""
    dims = [input_dim, 512, 256, 128, 64, 1]
    params = []
    for i in range(len(dims) - 1):
        fan_in, fan_out = dims[i], dims[i + 1]
        key, kw, kb = jax.random.split(key, 3)
        bound = 1.0 / (fan_in ** 0.5)
        w = jax.random.uniform(kw, (fan_in, fan_out), jnp.float32, -bound, bound)
        b = jax.random.uniform(kb, (1, fan_out), jnp.float32, -bound, bound)
        params.append((w, b))
    return params


def reference_forward(x, params):
    """Unfused full-precision reference (original module semantics, eval mode)."""
    h = x
    for i, (w, b) in enumerate(params):
        h = jnp.dot(h, w, precision=jax.lax.Precision.HIGHEST) + b
        if i < 3:               # ReLU after fc1, fc2, fc3 only
            h = jnp.maximum(h, 0.0)
    return h


if __name__ == "__main__":
    key = jax.random.PRNGKey(0)
    k_x, k_p = jax.random.split(key)

    batch = 16
    input_dim = 32                          # stands in for X_train.shape[1]
    x = jax.random.normal(k_x, (batch, input_dim), jnp.float32)
    params = init_params(k_p, input_dim)

    out = mlp_forward(x, params)            # bf16 matmuls, f32 accumulation
    out = jax.block_until_ready(out)

    ref = reference_forward(x, params)
    assert out.shape == (batch, 1), out.shape
    assert jnp.allclose(out, ref, atol=5e-2, rtol=5e-2), "mismatch vs JAX reference"

    print("KERNEL_OK")
</pallas_src>

<mosaic_0001>
module attributes {stable_mosaic.version = 11 : i64} {
  func.func @mlp_kernel(%arg0: i32, %arg1: memref<8x32xf32, #tpu.memory_space<vmem>>, %arg2: memref<32x512xbf16, #tpu.memory_space<vmem>>, %arg3: memref<1x512xf32, #tpu.memory_space<vmem>>, %arg4: memref<512x256xbf16, #tpu.memory_space<vmem>>, %arg5: memref<1x256xf32, #tpu.memory_space<vmem>>, %arg6: memref<256x128xbf16, #tpu.memory_space<vmem>>, %arg7: memref<1x128xf32, #tpu.memory_space<vmem>>, %arg8: memref<128x1xf32, #tpu.memory_space<vmem>>, %arg9: memref<1x1xf32, #tpu.memory_space<vmem>>, %arg10: memref<1x1x8xf32, #tpu.memory_space<vmem>>) attributes {dimension_semantics = [#tpu.dimension_semantics<parallel>], iteration_bounds = array<i64: 2>, scalar_prefetch = 0 : i64, scratch_operands = 0 : i64, tpu.core_type = #tpu.core_type<tc>, window_params = [{transform_indices = @transform_0, window_bounds = array<i64: 8, 32>}, {pipeline_mode = #tpu.pipeline_mode<synchronous>, transform_indices = @transform_1, window_bounds = array<i64: 32, 512>}, {pipeline_mode = #tpu.pipeline_mode<synchronous>, transform_indices = @transform_2, window_bounds = array<i64: 1, 512>}, {pipeline_mode = #tpu.pipeline_mode<synchronous>, transform_indices = @transform_3, window_bounds = array<i64: 512, 256>}, {pipeline_mode = #tpu.pipeline_mode<synchronous>, transform_indices = @transform_4, window_bounds = array<i64: 1, 256>}, {pipeline_mode = #tpu.pipeline_mode<synchronous>, transform_indices = @transform_5, window_bounds = array<i64: 256, 128>}, {pipeline_mode = #tpu.pipeline_mode<synchronous>, transform_indices = @transform_6, window_bounds = array<i64: 1, 128>}, {pipeline_mode = #tpu.pipeline_mode<synchronous>, transform_indices = @transform_7, window_bounds = array<i64: 128, 1>}, {pipeline_mode = #tpu.pipeline_mode<synchronous>, transform_indices = @transform_8, window_bounds = array<i64: 1, 1>}, {transform_indices = @transform_9, window_bounds = array<i64: 1, 1, 8>}]} {
    %c0 = arith.constant 0 : index
    %c0_0 = arith.constant 0 : index
    %0 = vector.load %arg1[%c0, %c0_0] : memref<8x32xf32, #tpu.memory_space<vmem>>, vector<8x32xf32>
    %1 = arith.truncf %0 : vector<8x32xf32> to vector<8x32xbf16>
    %c0_1 = arith.constant 0 : index
    %c0_2 = arith.constant 0 : index
    %2 = vector.load %arg2[%c0_1, %c0_2] : memref<32x512xbf16, #tpu.memory_space<vmem>>, vector<32x512xbf16>
    %cst = arith.constant dense<0.000000e+00> : vector<8x512xf32>
    %3 = tpu.matmul %1, %2, %cst {dimension_numbers = #tpu.dot_dimension_numbers<[1], [0], [0], [1], [0, 0, 1, 1], [], []>} : vector<8x32xbf16>, vector<32x512xbf16>, vector<8x512xf32> -> vector<8x512xf32>
    %c0_3 = arith.constant 0 : index
    %c0_4 = arith.constant 0 : index
    %4 = vector.load %arg3[%c0_3, %c0_4] : memref<1x512xf32, #tpu.memory_space<vmem>>, vector<1x512xf32>
    %5 = vector.broadcast %4 : vector<1x512xf32> to vector<8x512xf32>
    %6 = arith.addf %3, %5 : vector<8x512xf32>
    %cst_5 = arith.constant 0.000000e+00 : f32
    %7 = vector.broadcast %cst_5 : f32 to vector<8x512xf32>
    %8 = arith.maximumf %6, %7 : vector<8x512xf32>
    %9 = arith.truncf %8 : vector<8x512xf32> to vector<8x512xbf16>
    %c0_6 = arith.constant 0 : index
    %c0_7 = arith.constant 0 : index
    %10 = vector.load %arg4[%c0_6, %c0_7] : memref<512x256xbf16, #tpu.memory_space<vmem>>, vector<512x256xbf16>
    %cst_8 = arith.constant dense<0.000000e+00> : vector<8x256xf32>
    %11 = tpu.matmul %9, %10, %cst_8 {dimension_numbers = #tpu.dot_dimension_numbers<[1], [0], [0], [1], [0, 0, 1, 1], [], []>} : vector<8x512xbf16>, vector<512x256xbf16>, vector<8x256xf32> -> vector<8x256xf32>
    %c0_9 = arith.constant 0 : index
    %c0_10 = arith.constant 0 : index
    %12 = vector.load %arg5[%c0_9, %c0_10] : memref<1x256xf32, #tpu.memory_space<vmem>>, vector<1x256xf32>
    %13 = vector.broadcast %12 : vector<1x256xf32> to vector<8x256xf32>
    %14 = arith.addf %11, %13 : vector<8x256xf32>
    %cst_11 = arith.constant 0.000000e+00 : f32
    %15 = vector.broadcast %cst_11 : f32 to vector<8x256xf32>
    %16 = arith.maximumf %14, %15 : vector<8x256xf32>
    %17 = arith.truncf %16 : vector<8x256xf32> to vector<8x256xbf16>
    %c0_12 = arith.constant 0 : index
    %c0_13 = arith.constant 0 : index
    %18 = vector.load %arg6[%c0_12, %c0_13] : memref<256x128xbf16, #tpu.memory_space<vmem>>, vector<256x128xbf16>
    %cst_14 = arith.constant dense<0.000000e+00> : vector<8x128xf32>
    %19 = tpu.matmul %17, %18, %cst_14 {dimension_numbers = #tpu.dot_dimension_numbers<[1], [0], [0], [1], [0, 0, 1, 1], [], []>} : vector<8x256xbf16>, vector<256x128xbf16>, vector<8x128xf32> -> vector<8x128xf32>
    %c0_15 = arith.constant 0 : index
    %c0_16 = arith.constant 0 : index
    %20 = vector.load %arg7[%c0_15, %c0_16] : memref<1x128xf32, #tpu.memory_space<vmem>>, vector<1x128xf32>
    %21 = vector.broadcast %20 : vector<1x128xf32> to vector<8x128xf32>
    %22 = arith.addf %19, %21 : vector<8x128xf32>
    %cst_17 = arith.constant 0.000000e+00 : f32
    %23 = vector.broadcast %cst_17 : f32 to vector<8x128xf32>
    %24 = arith.maximumf %22, %23 : vector<8x128xf32>
    %25 = tpu.transpose %24, [1, 0] : vector<8x128xf32> -> vector<128x8xf32>
    %c0_18 = arith.constant 0 : index
    %c0_19 = arith.constant 0 : index
    %26 = vector.load %arg8[%c0_18, %c0_19] : memref<128x1xf32, #tpu.memory_space<vmem>>, vector<128x1xf32>
    %27 = vector.broadcast %26 : vector<128x1xf32> to vector<128x8xf32>
    %28 = arith.mulf %25, %27 : vector<128x8xf32>
    %cst_20 = arith.constant dense<0.000000e+00> : vector<8xf32>
    %29 = vector.multi_reduction <add>, %28, %cst_20 [0] : vector<128x8xf32> to vector<8xf32>
    %30 = vector.shape_cast %29 : vector<8xf32> to vector<1x8xf32>
    %c0_21 = arith.constant 0 : index
    %c0_22 = arith.constant 0 : index
    %31 = vector.load %arg9[%c0_21, %c0_22] : memref<1x1xf32, #tpu.memory_space<vmem>>, vector<1x1xf32>
    %32 = vector.broadcast %31 : vector<1x1xf32> to vector<1x8xf32>
    %33 = arith.addf %30, %32 : vector<1x8xf32>
    %34 = vector.shape_cast %33 : vector<1x8xf32> to vector<1x1x8xf32>
    %c0_23 = arith.constant 0 : index
    %c0_24 = arith.constant 0 : index
    %c0_25 = arith.constant 0 : index
    %35 = vector.load %arg10[%c0_23, %c0_24, %c0_25] : memref<1x1x8xf32, #tpu.memory_space<vmem>>, vector<1x1x8xf32>
    tpu.vector_store %arg10[%c0_23, %c0_24, %c0_25], %34 {strides = array<i32>} : memref<1x1x8xf32, #tpu.memory_space<vmem>>, vector<1x1x8xf32>,
    return
  }
  func.func @transform_0(%arg0: i32) -> (i32, i32) {
    %c0_i32 = arith.constant 0 : i32
    %c0_i32_0 = arith.constant 0 : i32
    return %arg0, %c0_i32 : i32, i32
  }
  func.func @transform_1(%arg0: i32) -> (i32, i32) {
    %c0_i32 = arith.constant 0 : i32
    %c0_i32_0 = arith.constant 0 : i32
    %c0_i32_1 = arith.constant 0 : i32
    return %c0_i32, %c0_i32_0 : i32, i32
  }
  func.func @transform_2(%arg0: i32) -> (i32, i32) {
    %c0_i32 = arith.constant 0 : i32
    %c0_i32_0 = arith.constant 0 : i32
    %c0_i32_1 = arith.constant 0 : i32
    return %c0_i32, %c0_i32_0 : i32, i32
  }
  func.func @transform_3(%arg0: i32) -> (i32, i32) {
    %c0_i32 = arith.constant 0 : i32
    %c0_i32_0 = arith.constant 0 : i32
    %c0_i32_1 = arith.constant 0 : i32
    return %c0_i32, %c0_i32_0 : i32, i32
  }
  func.func @transform_4(%arg0: i32) -> (i32, i32) {
    %c0_i32 = arith.constant 0 : i32
    %c0_i32_0 = arith.constant 0 : i32
    %c0_i32_1 = arith.constant 0 : i32
    return %c0_i32, %c0_i32_0 : i32, i32
  }
  func.func @transform_5(%arg0: i32) -> (i32, i32) {
    %c0_i32 = arith.constant 0 : i32
    %c0_i32_0 = arith.constant 0 : i32
    %c0_i32_1 = arith.constant 0 : i32
    return %c0_i32, %c0_i32_0 : i32, i32
  }
  func.func @transform_6(%arg0: i32) -> (i32, i32) {
    %c0_i32 = arith.constant 0 : i32
    %c0_i32_0 = arith.constant 0 : i32
    %c0_i32_1 = arith.constant 0 : i32
    return %c0_i32, %c0_i32_0 : i32, i32
  }
  func.func @transform_7(%arg0: i32) -> (i32, i32) {
    %c0_i32 = arith.constant 0 : i32
    %c0_i32_0 = arith.constant 0 : i32
    %c0_i32_1 = arith.constant 0 : i32
    return %c0_i32, %c0_i32_0 : i32, i32
  }
  func.func @transform_8(%arg0: i32) -> (i32, i32) {
    %c0_i32 = arith.constant 0 : i32
    %c0_i32_0 = arith.constant 0 : i32
    %c0_i32_1 = arith.constant 0 : i32
    return %c0_i32, %c0_i32_0 : i32, i32
  }
  func.func @transform_9(%arg0: i32) -> (i32, i32, i32) {
    %c0_i32 = arith.constant 0 : i32
    %c0_i32_0 = arith.constant 0 : i32
    %c0_i32_1 = arith.constant 0 : i32
    return %arg0, %c0_i32, %c0_i32_0 : i32, i32, i32
  }
}

</mosaic_0001>

<llo_original>
// kernel: tpu_custom_call.1
$region0: #{tpu_custom_call.1}
  #allocation0 [shape = 'u32[]', space=smem, size = 0x4, offset = 0x4, fixed_abs, tag = 'smem constant byte address 0x4 - core index']
  #allocation1 [shape = 'u32[144,128]{1,0:T(1,128)}', space=vmem, size = 0x12000, scoped, tag = 'internal scratch']
  #allocation2 [shape = 'f32[1,1]{1,0:T(1,128)S(1)}', space=vmem, size = 0x200, scoped, tag = 'scoped memory for tpu_custom_call.1']
  %s0 = inlined_call_operand.vmem [shape: f32[16,32], index: 0, kind: input, shape index: {}]
  %s1 = inlined_call_operand.hbm [shape: bf16[32,512], index: 1, kind: input, shape index: {}]
  %s2 = inlined_call_operand.vmem [shape: f32[1,512], index: 2, kind: input, shape index: {}]
  %s3 = inlined_call_operand.hbm [shape: bf16[512,256], index: 3, kind: input, shape index: {}]
  %s4 = inlined_call_operand.vmem [shape: f32[1,256], index: 4, kind: input, shape index: {}]
  %s5 = inlined_call_operand.vmem [shape: bf16[256,128], index: 5, kind: input, shape index: {}]
  %s6 = inlined_call_operand.vmem [shape: f32[1,128], index: 6, kind: input, shape index: {}]
  %s7 = inlined_call_operand.vmem [shape: f32[128,1], index: 7, kind: input, shape index: {}]
  %s8 = inlined_call_operand.<no memory space> [shape: f32[1,1], index: 8, kind: input, shape index: {}]
  %s9 = inlined_call_operand.hbm [shape: f32[2,1,8], index: 9, kind: output, shape index: {}]
  %s10 = sld [smem:[#allocation0]]
  $region77: #{tpu_custom_call.1} parent=0
    _
  %s12 = ssub.s32 1, %s10
  %s13 = scalar_select 0, %s12, %s10
  %v14 = vstv %s8
  %15 = vst [vmem:[#allocation2] sm:$0x1] %v14
  $region1: #{tpu_custom_call.1} parent=0
    #allocation3 [shape = 'u8[32768]{0}', space=vmem, size = 0x8000, scoped, tag = 'input window, operand 1, single buffered']
    #allocation4 [shape = 's32[2]{0}', space=sflag, size = 0x8, scoped, tag = 'scoped memory for tpu_custom_call.1']
    #allocation5 [shape = 's32[2]{0}', space=sflag, size = 0x8, scoped, tag = 'scoped memory for tpu_custom_call.1']
    #allocation6 [shape = 'u8[262144]{0}', space=vmem, size = 0x40000, scoped, tag = 'input window, operand 3, single buffered']
    #allocation7 [shape = 's32[1]{0}', space=sflag, size = 0x4, scoped, tag = 'scoped memory for tpu_custom_call.1']
    #allocation8 [shape = 'u8[1024]{0}', space=vmem, size = 0x400, scoped, tag = 'output window, operand 0']
    %16 = vsyncpa [#allocation4], 0
    %17 = vsyncpa [#allocation7], 0
    %18 = vsyncpa [#allocation5], 0
    %s19 = scalar_lea.sflag [#allocation5], 1
    %20 = vsyncpa %s19, 0
    loop: start=0, step=1, limit=4
    $region2: #{tpu_custom_call.1} parent=1 // loop_pre_header
      _
    $region3: #{tpu_custom_call.1} parent=1 // loop_header
      %s22 = sphi 0, %s26
      %p23 = scmp.ge.s32.totalorder %s22, 4
      %s32 = sphi 0, %s34
      %s35 = sphi 0, %s32
      %s36 = sphi 0, %s35
      %s52 = sphi 0, %s36
      %s56 = sphi 0, %s56
      %s58 = sphi 0, %s56
      %s59 = sphi 0, %s58
      %s73 = sphi 0, %s59
      %s77 = sphi 0, %s77
      %s79 = sphi 0, %s77
      %s80 = sphi 0, %s79
      %s94 = sphi 0, %s80
      %s98 = sphi 0, %s98
      %s100 = sphi 0, %s98
      %s101 = sphi 0, %s100
      %s115 = sphi 0, %s101
      %s119 = sphi 0, %s119
      %s121 = sphi 0, %s119
      %s122 = sphi 0, %s121
      %s136 = sphi 0, %s122
      %s140 = sphi 0, %s140
      %s142 = sphi 0, %s140
      %s143 = sphi 0, %s142
      %s157 = sphi 0, %s143
      %s161 = sphi 0, %s161
      %s163 = sphi 0, %s161
      %s164 = sphi 0, %s163
      %s178 = sphi 0, %s164
      %s182 = sphi 0, %s182
      %s184 = sphi 0, %s182
      %s185 = sphi 0, %s184
      %s199 = sphi 0, %s185
      %s203 = sphi 0, %s203
      %s205 = sphi 0, %s203
      %s206 = sphi 0, %s205
      %s220 = sphi 0, %s206
      %s226 = sphi 0, %s228
      %s229 = sphi 0, %s226
      %s230 = sphi 0, %s229
      %s246 = sphi 0, %s230
    $region4: #{tpu_custom_call.1} parent=1 // loop_header_branch
      %25 = sbr.rel (%p23) target = $region8
    $region5: #{tpu_custom_call.1} parent=1 // loop_body
      %s27 = ssub.s32 %s22, 1
      %s28 = ssub.s32 %s22, 2
      %s29 = sadd.s32 %s22, 1
      %s30 = ssub.s32 %s22, %s29
      %p31 = scmp.eq.s32.totalorder %s30, 0
      %s33 = sadd.s32 %s32, 1
      %s34 = scalar_select %p31, %s32, %s33
      %p37 = pneg %p31
      %p38 = scmp.eq.s32.totalorder %s22, 1
      %p39 = por %p37, %p38
      %p40 = scmp.ne.s32.totalorder %s32, %s35
      %p41 = scmp.eq.s32.totalorder %s22, 0
      %p42 = por %p40, %p41
      %p43 = scmp.ne.s32.totalorder %s32, %s35
      %p44 = scmp.eq.s32.totalorder %s27, 1
      %p45 = por %p43, %p44
      %p46 = scmp.ne.s32.totalorder %s35, %s36
      %p47 = scmp.eq.s32.totalorder %s27, 0
      %p48 = por %p46, %p47
      %p49 = scmp.ne.s32.totalorder %s35, %s36
      %p50 = scmp.eq.s32.totalorder %s28, 1
      %p51 = por %p49, %p50
      %p53 = scmp.ne.s32.totalorder %s36, %s52
      %p54 = scmp.eq.s32.totalorder %s28, 0
      %p55 = por %p53, %p54
      %s57 = sadd.s32 %s56, 1
      %p60 = scmp.eq.s32.totalorder %s22, 1
      %p61 = scmp.ne.s32.totalorder %s56, %s58
      %p62 = scmp.eq.s32.totalorder %s22, 0
      %p63 = por %p61, %p62
      %p64 = scmp.ne.s32.totalorder %s56, %s58
      %p65 = scmp.eq.s32.totalorder %s27, 1
      %p66 = por %p64, %p65
      %p67 = scmp.ne.s32.totalorder %s58, %s59
      %p68 = scmp.eq.s32.totalorder %s27, 0
      %p69 = por %p67, %p68
      %p70 = scmp.ne.s32.totalorder %s58, %s59
      %p71 = scmp.eq.s32.totalorder %s28, 1
      %p72 = por %p70, %p71
      %p74 = scmp.ne.s32.totalorder %s59, %s73
      %p75 = scmp.eq.s32.totalorder %s28, 0
      %p76 = por %p74, %p75
      %s78 = sadd.s32 %s77, 1
      %p81 = scmp.eq.s32.totalorder %s22, 1
      %p82 = scmp.ne.s32.totalorder %s77, %s79
      %p83 = scmp.eq.s32.totalorder %s22, 0
      %p84 = por %p82, %p83
      %p85 = scmp.ne.s32.totalorder %s77, %s79
      %p86 = scmp.eq.s32.totalorder %s27, 1
      %p87 = por %p85, %p86
      %p88 = scmp.ne.s32.totalorder %s79, %s80
      %p89 = scmp.eq.s32.totalorder %s27, 0
      %p90 = por %p88, %p89
      %p91 = scmp.ne.s32.totalorder %s79, %s80
      %p92 = scmp.eq.s32.totalorder %s28, 1
      %p93 = por %p91, %p92
      %p95 = scmp.ne.s32.totalorder %s80, %s94
      %p96 = scmp.eq.s32.totalorder %s28, 0
      %p97 = por %p95, %p96
      %s99 = sadd.s32 %s98, 1
      %p102 = scmp.eq.s32.totalorder %s22, 1
      %p103 = scmp.ne.s32.totalorder %s98, %s100
      %p104 = scmp.eq.s32.totalorder %s22, 0
      %p105 = por %p103, %p104
      %p106 = scmp.ne.s32.totalorder %s98, %s100
      %p107 = scmp.eq.s32.totalorder %s27, 1
      %p108 = por %p106, %p107
      %p109 = scmp.ne.s32.totalorder %s100, %s101
      %p110 = scmp.eq.s32.totalorder %s27, 0
      %p111 = por %p109, %p110
      %p112 = scmp.ne.s32.totalorder %s100, %s101
      %p113 = scmp.eq.s32.totalorder %s28, 1
      %p114 = por %p112, %p113
      %p116 = scmp.ne.s32.totalorder %s101, %s115
      %p117 = scmp.eq.s32.totalorder %s28, 0
      %p118 = por %p116, %p117
      %s120 = sadd.s32 %s119, 1
      %p123 = scmp.eq.s32.totalorder %s22, 1
      %p124 = scmp.ne.s32.totalorder %s119, %s121
      %p125 = scmp.eq.s32.totalorder %s22, 0
      %p126 = por %p124, %p125
      %p127 = scmp.ne.s32.totalorder %s119, %s121
      %p128 = scmp.eq.s32.totalorder %s27, 1
      %p129 = por %p127, %p128
      %p130 = scmp.ne.s32.totalorder %s121, %s122
      %p131 = scmp.eq.s32.totalorder %s27, 0
      %p132 = por %p130, %p131
      %p133 = scmp.ne.s32.totalorder %s121, %s122
      %p134 = scmp.eq.s32.totalorder %s28, 1
      %p135 = por %p133, %p134
      %p137 = scmp.ne.s32.totalorder %s122, %s136
      %p138 = scmp.eq.s32.totalorder %s28, 0
      %p139 = por %p137, %p138
      %s141 = sadd.s32 %s140, 1
      %p144 = scmp.eq.s32.totalorder %s22, 1
      %p145 = scmp.ne.s32.totalorder %s140, %s142
      %p146 = scmp.eq.s32.totalorder %s22, 0
      %p147 = por %p145, %p146
      %p148 = scmp.ne.s32.totalorder %s140, %s142
      %p149 = scmp.eq.s32.totalorder %s27, 1
      %p150 = por %p148, %p149
      %p151 = scmp.ne.s32.totalorder %s142, %s143
      %p152 = scmp.eq.s32.totalorder %s27, 0
      %p153 = por %p151, %p152
      %p154 = scmp.ne.s32.totalorder %s142, %s143
      %p155 = scmp.eq.s32.totalorder %s28, 1
      %p156 = por %p154, %p155
      %p158 = scmp.ne.s32.totalorder %s143, %s157
      %p159 = scmp.eq.s32.totalorder %s28, 0
      %p160 = por %p158, %p159
      %s162 = sadd.s32 %s161, 1
      %p165 = scmp.eq.s32.totalorder %s22, 1
      %p166 = scmp.ne.s32.totalorder %s161, %s163
      %p167 = scmp.eq.s32.totalorder %s22, 0
      %p168 = por %p166, %p167
      %p169 = scmp.ne.s32.totalorder %s161, %s163
      %p170 = scmp.eq.s32.totalorder %s27, 1
      %p171 = por %p169, %p170
      %p172 = scmp.ne.s32.totalorder %s163, %s164
      %p173 = scmp.eq.s32.totalorder %s27, 0
      %p174 = por %p172, %p173
      %p175 = scmp.ne.s32.totalorder %s163, %s164
      %p176 = scmp.eq.s32.totalorder %s28, 1
      %p177 = por %p175, %p176
      %p179 = scmp.ne.s32.totalorder %s164, %s178
      %p180 = scmp.eq.s32.totalorder %s28, 0
      %p181 = por %p179, %p180
      %s183 = sadd.s32 %s182, 1
      %p186 = scmp.eq.s32.totalorder %s22, 1
      %p187 = scmp.ne.s32.totalorder %s182, %s184
      %p188 = scmp.eq.s32.totalorder %s22, 0
      %p189 = por %p187, %p188
      %p190 = scmp.ne.s32.totalorder %s182, %s184
      %p191 = scmp.eq.s32.totalorder %s27, 1
      %p192 = por %p190, %p191
      %p193 = scmp.ne.s32.totalorder %s184, %s185
      %p194 = scmp.eq.s32.totalorder %s27, 0
      %p195 = por %p193, %p194
      %p196 = scmp.ne.s32.totalorder %s184, %s185
      %p197 = scmp.eq.s32.totalorder %s28, 1
      %p198 = por %p196, %p197
      %p200 = scmp.ne.s32.totalorder %s185, %s199
      %p201 = scmp.eq.s32.totalorder %s28, 0
      %p202 = por %p200, %p201
      %s204 = sadd.s32 %s203, 1
      %p207 = scmp.eq.s32.totalorder %s22, 1
      %p208 = scmp.ne.s32.totalorder %s203, %s205
      %p209 = scmp.eq.s32.totalorder %s22, 0
      %p210 = por %p208, %p209
      %p211 = scmp.ne.s32.totalorder %s203, %s205
      %p212 = scmp.eq.s32.totalorder %s27, 1
      %p213 = por %p211, %p212
      %p214 = scmp.ne.s32.totalorder %s205, %s206
      %p215 = scmp.eq.s32.totalorder %s27, 0
      %p216 = por %p214, %p215
      %p217 = scmp.ne.s32.totalorder %s205, %s206
      %p218 = scmp.eq.s32.totalorder %s28, 1
      %p219 = por %p217, %p218
      %p221 = scmp.ne.s32.totalorder %s206, %s220
      %p222 = scmp.eq.s32.totalorder %s28, 0
      %p223 = por %p221, %p222
      %s224 = ssub.s32 %s22, %s29
      %p225 = scmp.eq.s32.totalorder %s224, 0
      %s227 = sadd.s32 %s226, 1
      %s228 = scalar_select %p225, %s226, %s227
      %p231 = pneg %p225
      %p232 = scmp.eq.s32.totalorder %s22, 1
      %p233 = por %p231, %p232
      %p234 = scmp.ne.s32.totalorder %s226, %s229
      %p235 = scmp.eq.s32.totalorder %s22, 0
      %p236 = por %p234, %p235
      %p237 = scmp.ne.s32.totalorder %s226, %s229
      %p238 = scmp.eq.s32.totalorder %s27, 1
      %p239 = por %p237, %p238
      %p240 = scmp.ne.s32.totalorder %s229, %s230
      %p241 = scmp.eq.s32.totalorder %s27, 0
      %p242 = por %p240, %p241
      %p243 = scmp.ne.s32.totalorder %s229, %s230
      %p244 = scmp.eq.s32.totalorder %s28, 1
      %p245 = por %p243, %p244
      %p247 = scmp.ne.s32.totalorder %s230, %s246
      %p248 = scmp.eq.s32.totalorder %s28, 0
      %p249 = por %p247, %p248
      %p250 = scmp.le.s32.totalorder 1, %s22
      %p251 = scmp.lt.s32.totalorder %s22, 3
      %p252 = pnand %p250, %p251
      %p253 = pneg %p252
      // Predicated region
      $region9: #{tpu_custom_call.1} parent=5 // pred_check
        _
      $region10: #{tpu_custom_call.1} parent=5 // pred_check_branch
        %255 = sbr.rel (%p252) target = $region12
      $region11: #{tpu_custom_call.1} parent=5 // pred_region
        %s256 = ssub.s32 %s22, 1
        // Predicated region
        $region13: #{tpu_custom_call.1} parent=11 // pred_check
          %p257 = pneg %p69
        $region14: #{tpu_custom_call.1} parent=11 // pred_check_branch
          %259 = sbr.rel (%p257) target = $region16
        $region15: #{tpu_custom_call.1} parent=11 // pred_region
          %s261 = ssub.s32 1024, 1024
          %262 = vsyncadd [#allocation4], %s261
          %s263 = sshll.u32 [#allocation3], 4
          %s264 = int_to_ptr.vmem [resolvable:$true] %s263
          %269 = dma.hbm_to_vmem [thread:$0]  %s1, 1024, %s264, [#allocation4], 256, 256, 16
        $region16: #{tpu_custom_call.1} parent=11 // pred_fallthru
          _
        // Predicated region
        $region17: #{tpu_custom_call.1} parent=11 // pred_check
          %p270 = pneg %p90
        $region18: #{tpu_custom_call.1} parent=11 // pred_check_branch
          %272 = sbr.rel (%p270) target = $region20
        $region19: #{tpu_custom_call.1} parent=11 // pred_region
          _
        $region20: #{tpu_custom_call.1} parent=11 // pred_fallthru
          _
        // Predicated region
        $region21: #{tpu_custom_call.1} parent=11 // pred_check
          %p273 = pneg %p111
        $region22: #{tpu_custom_call.1} parent=11 // pred_check_branch
          %275 = sbr.rel (%p273) target = $region24
        $region23: #{tpu_custom_call.1} parent=11 // pred_region
          %s277 = ssub.s32 8192, 8192
          %278 = vsyncadd [#allocation7], %s277
          %s279 = sshll.u32 [#allocation6], 4
          %s280 = int_to_ptr.vmem [resolvable:$true] %s279
          %285 = dma.hbm_to_vmem [thread:$0]  %s3, 8192, %s280, [#allocation7], 128, 128, 8
        $region24: #{tpu_custom_call.1} parent=11 // pred_fallthru
          _
        // Predicated region
        $region25: #{tpu_custom_call.1} parent=11 // pred_check
          %p286 = pneg %p132
        $region26: #{tpu_custom_call.1} parent=11 // pred_check_branch
          %288 = sbr.rel (%p286) target = $region28
        $region27: #{tpu_custom_call.1} parent=11 // pred_region
          _
        $region28: #{tpu_custom_call.1} parent=11 // pred_fallthru
          _
        // Predicated region
        $region29: #{tpu_custom_call.1} parent=11 // pred_check
          %p289 = pneg %p153
        $region30: #{tpu_custom_call.1} parent=11 // pred_check_branch
          %291 = sbr.rel (%p289) target = $region32
        $region31: #{tpu_custom_call.1} parent=11 // pred_region
          _
        $region32: #{tpu_custom_call.1} parent=11 // pred_fallthru
          _
        // Predicated region
        $region33: #{tpu_custom_call.1} parent=11 // pred_check
          %p292 = pneg %p174
        $region34: #{tpu_custom_call.1} parent=11 // pred_check_branch
          %294 = sbr.rel (%p292) target = $region36
        $region35: #{tpu_custom_call.1} parent=11 // pred_region
          _
        $region36: #{tpu_custom_call.1} parent=11 // pred_fallthru
          _
        // Predicated region
        $region37: #{tpu_custom_call.1} parent=11 // pred_check
          %p295 = pneg %p195
        $region38: #{tpu_custom_call.1} parent=11 // pred_check_branch
          %297 = sbr.rel (%p295) target = $region40
        $region39: #{tpu_custom_call.1} parent=11 // pred_region
          _
        $region40: #{tpu_custom_call.1} parent=11 // pred_fallthru
          _
        // Predicated region
        $region41: #{tpu_custom_call.1} parent=11 // pred_check
          %p298 = pneg %p216
        $region42: #{tpu_custom_call.1} parent=11 // pred_check_branch
          %300 = sbr.rel (%p298) target = $region44
        $region43: #{tpu_custom_call.1} parent=11 // pred_region
          _
        $region44: #{tpu_custom_call.1} parent=11 // pred_fallthru
          _
      $region12: #{tpu_custom_call.1} parent=5 // pred_fallthru
        _
      %p301 = scmp.lt.s32.totalorder %s22, 2
      // Predicated region
      $region45: #{tpu_custom_call.1} parent=5 // pred_check
        %p302 = pneg %p301
      $region46: #{tpu_custom_call.1} parent=5 // pred_check_branch
        %304 = sbr.rel (%p302) target = $region48
      $region47: #{tpu_custom_call.1} parent=5 // pred_region
        // Predicated region
        $region49: #{tpu_custom_call.1} parent=47 // pred_check
          %p305 = pneg %p42
        $region50: #{tpu_custom_call.1} parent=47 // pred_check_branch
          %307 = sbr.rel (%p305) target = $region52
        $region51: #{tpu_custom_call.1} parent=47 // pred_region
          %p308 = scmp.lt.s32.totalorder %s22, 1
          %s309 = scalar_select %p308, %s22, 1
          %s310 = smul.addr %s309, 8
          %s311 = scalar_lea.vmem %s0, %s310
        $region52: #{tpu_custom_call.1} parent=47 // pred_fallthru
          _
      $region48: #{tpu_custom_call.1} parent=5 // pred_fallthru
        _
      %p312 = scmp.le.s32.totalorder 1, %s22
      %p313 = scmp.lt.s32.totalorder %s22, 3
      %p314 = pnand %p312, %p313
      %p315 = pneg %p314
      // Predicated region
      $region53: #{tpu_custom_call.1} parent=5 // pred_check
        _
      $region54: #{tpu_custom_call.1} parent=5 // pred_check_branch
        %317 = sbr.rel (%p314) target = $region56
      $region55: #{tpu_custom_call.1} parent=5 // pred_region
        %s318 = ssub.s32 %s22, 1
        // Predicated region
        $region57: #{tpu_custom_call.1} parent=55 // pred_check
          %p319 = pneg %p69
        $region58: #{tpu_custom_call.1} parent=55 // pred_check_branch
          %321 = sbr.rel (%p319) target = $region60
        $region59: #{tpu_custom_call.1} parent=55 // pred_region
          %322 = dma.done [#allocation4], 1024
        $region60: #{tpu_custom_call.1} parent=55 // pred_fallthru
          _
        // Predicated region
        $region61: #{tpu_custom_call.1} parent=55 // pred_check
          %p323 = pneg %p111
        $region62: #{tpu_custom_call.1} parent=55 // pred_check_branch
          %325 = sbr.rel (%p323) target = $region64
        $region63: #{tpu_custom_call.1} parent=55 // pred_region
          %326 = dma.done [#allocation7], 8192
        $region64: #{tpu_custom_call.1} parent=55 // pred_fallthru
          _
        %p327 = scmp.lt.s32.totalorder %s27, 1
        %s328 = scalar_select %p327, %s27, 1
        %s329 = smul.addr %s328, 8
        %s330 = scalar_lea.vmem %s0, %s329
        %p331 = pneg %p48
        %p332 = pneg %p45
        %p333 = pneg %p69
        %p334 = pneg %p66
        %p335 = pneg %p90
        %p336 = pneg %p87
        %p337 = pneg %p111
        %p338 = pneg %p108
        %p339 = pneg %p132
        %p340 = pneg %p129
        %p341 = pneg %p153
        %p342 = pneg %p150
        %p343 = pneg %p174
        %p344 = pneg %p171
        %p345 = pneg %p195
        %p346 = pneg %p192
        %p347 = pneg %p216
        %p348 = pneg %p213
        %p349 = pneg %p242
        %p350 = pneg %p239
        %s351 = sand.u32 %s229, 1
        %s352 = scalar_lea.sflag [#allocation5], %s351
        %s353 = sand.u32 %s229, 1
        %s354 = scalar_lea.vmem [#allocation8], %s353
        %p355 = scmp.lt.s32.totalorder %s27, 1
        %s356 = scalar_select %p355, %s27, 1
        %s357 = smul.addr %s356, 8
        %s358 = scalar_lea.vmem %s0, %s357
        %v360 = vld [vmem:[%s358] sm:$0xff]
        %v361 = vpack.c.bf16 %v360, %v360
        %v362 = vld [vmem:[#allocation3] sm:$0xff]
        %v363 = vld [vmem:[#allocation3 + $0x8] sm:$0xff]
        %v364 = vld [vmem:[#allocation3 + $0x10] sm:$0xff]
        %v365 = vld [vmem:[#allocation3 + $0x18] sm:$0xff]
        %v366 = vld [vmem:[#allocation3 + $0x20] sm:$0xff]
        %v367 = vld [vmem:[#allocation3 + $0x28] sm:$0xff]
        %v368 = vld [vmem:[#allocation3 + $0x30] sm:$0xff]
        %v369 = vld [vmem:[#allocation3 + $0x38] sm:$0xff]
        %v370 = vld [vmem:[%s2] sm:$0xf]
        %v372 = vlaneseq
        %v373 = vshrl.u32 %v372, 7
        %v374 = vsub.s32 0, %v373
        %v375 = vrot.slane %v370, %v374
        %v376 = vlaneseq
        %v377 = vshrl.u32 %v376, 7
        %v378 = vsub.s32 1, %v377
        %v379 = vrot.slane %v370, %v378
        %v380 = vlaneseq
        %v381 = vshrl.u32 %v380, 7
        %v382 = vsub.s32 2, %v381
        %v383 = vrot.slane %v370, %v382
        %v384 = vlaneseq
        %v385 = vshrl.u32 %v384, 7
        %v386 = vsub.s32 3, %v385
        %v387 = vrot.slane %v370, %v386
        %v400 = vunpack.c.l.b16 %v362
        %v401 = vunpack.c.h.b16 %v362
        %v402 = vunpack.c.l.b16 %v363
        %v403 = vunpack.c.h.b16 %v363
        %v404 = vunpack.c.l.b16 %v364
        %v405 = vunpack.c.h.b16 %v364
        %v406 = vunpack.c.l.b16 %v365
        %v407 = vunpack.c.h.b16 %v365
        %v408 = vunpack.c.l.b16 %v366
        %v409 = vunpack.c.h.b16 %v366
        %v410 = vunpack.c.l.b16 %v367
        %v411 = vunpack.c.h.b16 %v367
        %v412 = vunpack.c.l.b16 %v368
        %v413 = vunpack.c.h.b16 %v368
        %v414 = vunpack.c.l.b16 %v369
        %v415 = vunpack.c.h.b16 %v369
        %v416 = vpack.c.b16 %v404, %v400
        %v417 = vpack.c.b16 %v405, %v401
        %v418 = vpack.c.b16 %v406, %v402
        %v419 = vpack.c.b16 %v407, %v403
        %v420 = vpack.c.b16 %v412, %v408
        %v421 = vpack.c.b16 %v413, %v409
        %v422 = vpack.c.b16 %v414, %v410
        %v423 = vpack.c.b16 %v415, %v411
        %vm432 = vcmask 261120
        %v434 = vsel %vm432, %v361, 0
        %436 = vmatprep.subr.bf16.mxu0 %v417
        %437 = vmatpush1.bf16.msra.mxu0 %v416
        %438 = vmatprep.subr.bf16.mxu0 %v421
        %439 = vmatpush1.bf16.msra.mxu0 %v420
        %440 = vmatprep.subr.bf16.mxu0 0
        %441 = vmatpush1.bf16.msra.mxu0 0
        %442 = vmatprep.subr.bf16.mxu0 0
        %443 = vmatpush1.bf16.msra.mxu0 0
        %444 = vmatprep.subr.bf16.mxu0 0
        %445 = vmatpush1.bf16.msra.mxu0 0
        %446 = vmatprep.subr.bf16.mxu0 0
        %447 = vmatpush1.bf16.msra.mxu0 0
        %448 = vmatprep.subr.bf16.mxu0 0
        %449 = vmatpush1.bf16.msra.mxu0 0
        %450 = vmatprep.subr.bf16.mxu0 0
        %451 = vmatpush1.bf16.msra.mxu0 0
        %452 = vmatprep.subr.bf16.mxu0 0
        %453 = vmatpush1.bf16.msra.mxu0 0
        %454 = vmatprep.subr.bf16.mxu0 0
        %455 = vmatpush1.bf16.msra.mxu0 0
        %456 = vmatprep.subr.bf16.mxu0 0
        %457 = vmatpush1.bf16.msra.mxu0 0
        %458 = vmatprep.subr.bf16.mxu0 0
        %459 = vmatpush1.bf16.msra.mxu0 0
        %460 = vmatprep.subr.bf16.mxu0 0
        %461 = vmatpush1.bf16.msra.mxu0 0
        %462 = vmatprep.subr.bf16.mxu0 0
        %463 = vmatpush1.bf16.msra.mxu0 0
        %464 = vmatprep.subr.bf16.mxu0 0
        %465 = vmatpush1.bf16.msra.mxu0 0
        %466 = vmatprep.subr.bf16.mxu0 0
        %467 = vmatpush1.bf16.msra.mxu0 0
        %468 = vmatprep.mubr.bf16.mxu0 0
        %469 = vmatmul.mubr.bf16.gmra.mrb[0].mxu0 %v434
        %v470 = vpop.f32.mrb[0].mxu0
        %v471 = vadd.f32 %v375, %v470
        %v472 = vpop.f32.mrb[0].mxu0
        %v473 = vadd.f32 %v379, %v472
        %v474 = vpop.f32.mrb[0].mxu0
        %v475 = vpop.f32.mrb[0].mxu0
        %476 = vdwg.mxu0
        %477 = vmatprep.subr.bf16.mxu0 %v419
        %478 = vmatpush1.bf16.msra.mxu0 %v418
        %479 = vmatprep.subr.bf16.mxu0 %v423
        %480 = vmatpush1.bf16.msra.mxu0 %v422
        %481 = vmatprep.subr.bf16.mxu0 0
        %482 = vmatpush1.bf16.msra.mxu0 0
        %483 = vmatprep.subr.bf16.mxu0 0
        %484 = vmatpush1.bf16.msra.mxu0 0
        %485 = vmatprep.subr.bf16.mxu0 0
        %486 = vmatpush1.bf16.msra.mxu0 0
        %487 = vmatprep.subr.bf16.mxu0 0
        %488 = vmatpush1.bf16.msra.mxu0 0
        %489 = vmatprep.subr.bf16.mxu0 0
        %490 = vmatpush1.bf16.msra.mxu0 0
        %491 = vmatprep.subr.bf16.mxu0 0
        %492 = vmatpush1.bf16.msra.mxu0 0
        %493 = vmatprep.subr.bf16.mxu0 0
        %494 = vmatpush1.bf16.msra.mxu0 0
        %495 = vmatprep.subr.bf16.mxu0 0
        %496 = vmatpush1.bf16.msra.mxu0 0
        %497 = vmatprep.subr.bf16.mxu0 0
        %498 = vmatpush1.bf16.msra.mxu0 0
        %499 = vmatprep.subr.bf16.mxu0 0
        %500 = vmatpush1.bf16.msra.mxu0 0
        %501 = vmatprep.subr.bf16.mxu0 0
        %502 = vmatpush1.bf16.msra.mxu0 0
        %503 = vmatprep.subr.bf16.mxu0 0
        %504 = vmatpush1.bf16.msra.mxu0 0
        %505 = vmatprep.subr.bf16.mxu0 0
        %506 = vmatpush1.bf16.msra.mxu0 0
        %507 = vmatprep.subr.bf16.mxu0 0
        %508 = vmatpush1.bf16.msra.mxu0 0
        %509 = vmatprep.mubr.bf16.mxu0 0
        %510 = vmatmul.mubr.bf16.gmra.mrb[0].mxu0 %v434
        %v511 = vpop.f32.mrb[0].mxu0
        %v512 = vadd.f32 %v383, %v511
        %v513 = vpop.f32.mrb[0].mxu0
        %v514 = vadd.f32 %v387, %v513
        %v515 = vpop.f32.mrb[0].mxu0
        %v516 = vpop.f32.mrb[0].mxu0
        %517 = vdwg.mxu0
        %v518 = vmax.f32 %v471, 0.0
        %v519 = vmax.f32 %v473, 0.0
        %v520 = vmax.f32 %v512, 0.0
        %v521 = vmax.f32 %v514, 0.0
        %v522 = vpack.c.bf16 %v518, %v518
        %v523 = vpack.c.bf16 %v519, %v519
        %v524 = vpack.c.bf16 %v520, %v520
        %v525 = vpack.c.bf16 %v521, %v521
        %v526 = vld [vmem:[#allocation6] sm:$0xff]
        %v527 = vld [vmem:[#allocation6 + $0x8] sm:$0xff]
        %v528 = vld [vmem:[#allocation6 + $0x10] sm:$0xff]
        %v529 = vld [vmem:[#allocation6 + $0x18] sm:$0xff]
        %v530 = vld [vmem:[#allocation6 + $0x20] sm:$0xff]
        %v531 = vld [vmem:[#allocation6 + $0x28] sm:$0xff]
        %v532 = vld [vmem:[#allocation6 + $0x30] sm:$0xff]
        %v533 = vld [vmem:[#allocation6 + $0x38] sm:$0xff]
        %v534 = vld [vmem:[#allocation6 + $0x40] sm:$0xff]
        %v535 = vld [vmem:[#allocation6 + $0x48] sm:$0xff]
        %v536 = vld [vmem:[#allocation6 + $0x50] sm:$0xff]
        %v537 = vld [vmem:[#allocation6 + $0x58] sm:$0xff]
        %v538 = vld [vmem:[#allocation6 + $0x60] sm:$0xff]
        %v539 = vld [vmem:[#allocation6 + $0x68] sm:$0xff]
        %v540 = vld [vmem:[#allocation6 + $0x70] sm:$0xff]
        %v541 = vld [vmem:[#allocation6 + $0x78] sm:$0xff]
        %v542 = vld [vmem:[#allocation6 + $0x80] sm:$0xff]
        %v543 = vld [vmem:[#allocation6 + $0x88] sm:$0xff]
        %v544 = vld [vmem:[#allocation6 + $0x90] sm:$0xff]
        %v545 = vld [vmem:[#allocation6 + $0x98] sm:$0xff]
        %v546 = vld [vmem:[#allocation6 + $0xa0] sm:$0xff]
        %v547 = vld [vmem:[#allocation6 + $0xa8] sm:$0xff]
        %v548 = vld [vmem:[#allocation6 + $0xb0] sm:$0xff]
        %v549 = vld [vmem:[#allocation6 + $0xb8] sm:$0xff]
        %v550 = vld [vmem:[#allocation6 + $0xc0] sm:$0xff]
        %v551 = vld [vmem:[#allocation6 + $0xc8] sm:$0xff]
        %v552 = vld [vmem:[#allocation6 + $0xd0] sm:$0xff]
        %v553 = vld [vmem:[#allocation6 + $0xd8] sm:$0xff]
        %v554 = vld [vmem:[#allocation6 + $0xe0] sm:$0xff]
        %v555 = vld [vmem:[#allocation6 + $0xe8] sm:$0xff]
        %v556 = vld [vmem:[#allocation6 + $0xf0] sm:$0xff]
        %v557 = vld [vmem:[#allocation6 + $0xf8] sm:$0xff]
        %v558 = vld [vmem:[#allocation6 + $0x100] sm:$0xff]
        %v559 = vld [vmem:[#allocation6 + $0x108] sm:$0xff]
        %v560 = vld [vmem:[#allocation6 + $0x110] sm:$0xff]
        %v561 = vld [vmem:[#allocation6 + $0x118] sm:$0xff]
        %v562 = vld [vmem:[#allocation6 + $0x120] sm:$0xff]
        %v563 = vld [vmem:[#allocation6 + $0x128] sm:$0xff]
        %v564 = vld [vmem:[#allocation6 + $0x130] sm:$0xff]
        %v565 = vld [vmem:[#allocation6 + $0x138] sm:$0xff]
        %v566 = vld [vmem:[#allocation6 + $0x140] sm:$0xff]
        %v567 = vld [vmem:[#allocation6 + $0x148] sm:$0xff]
        %v568 = vld [vmem:[#allocation6 + $0x150] sm:$0xff]
        %v569 = vld [vmem:[#allocation6 + $0x158] sm:$0xff]
        %v570 = vld [vmem:[#allocation6 + $0x160] sm:$0xff]
        %v571 = vld [vmem:[#allocation6 + $0x168] sm:$0xff]
        %v572 = vld [vmem:[#allocation6 + $0x170] sm:$0xff]
        %v573 = vld [vmem:[#allocation6 + $0x178] sm:$0xff]
        %v574 = vld [vmem:[#allocation6 + $0x180] sm:$0xff]
        %v575 = vld [vmem:[#allocation6 + $0x188] sm:$0xff]
        %v576 = vld [vmem:[#allocation6 + $0x190] sm:$0xff]
        %v577 = vld [vmem:[#allocation6 + $0x198] sm:$0xff]
        %v578 = vld [vmem:[#allocation6 + $0x1a0] sm:$0xff]
        %v579 = vld [vmem:[#allocation6 + $0x1a8] sm:$0xff]
        %v580 = vld [vmem:[#allocation6 + $0x1b0] sm:$0xff]
        %v581 = vld [vmem:[#allocation6 + $0x1b8] sm:$0xff]
        %v582 = vld [vmem:[#allocation6 + $0x1c0] sm:$0xff]
        %v583 = vld [vmem:[#allocation6 + $0x1c8] sm:$0xff]
        %v584 = vld [vmem:[#allocation6 + $0x1d0] sm:$0xff]
        %v585 = vld [vmem:[#allocation6 + $0x1d8] sm:$0xff]
        %v586 = vld [vmem:[#allocation6 + $0x1e0] sm:$0xff]
        %v587 = vld [vmem:[#allocation6 + $0x1e8] sm:$0xff]
        %v588 = vld [vmem:[#allocation6 + $0x1f0] sm:$0xff]
        %v589 = vld [vmem:[#allocation6 + $0x1f8] sm:$0xff]
        %v590 = vld [vmem:[%s4] sm:$0x3]
        %v592 = vlaneseq
        %v593 = vshrl.u32 %v592, 7
        %v594 = vsub.s32 0, %v593
        %v595 = vrot.slane %v590, %v594
        %v596 = vlaneseq
        %v597 = vshrl.u32 %v596, 7
        %v598 = vsub.s32 1, %v597
        %v599 = vrot.slane %v590, %v598
        %v666 = vunpack.c.l.b16 %v526
        %v667 = vunpack.c.h.b16 %v526
        %v668 = vunpack.c.l.b16 %v527
        %v669 = vunpack.c.h.b16 %v527
        %v670 = vunpack.c.l.b16 %v528
        %v671 = vunpack.c.h.b16 %v528
        %v672 = vunpack.c.l.b16 %v529
        %v673 = vunpack.c.h.b16 %v529
        %v674 = vunpack.c.l.b16 %v530
        %v675 = vunpack.c.h.b16 %v530
        %v676 = vunpack.c.l.b16 %v531
        %v677 = vunpack.c.h.b16 %v531
        %v678 = vunpack.c.l.b16 %v532
        %v679 = vunpack.c.h.b16 %v532
        %v680 = vunpack.c.l.b16 %v533
        %v681 = vunpack.c.h.b16 %v533
        %v682 = vunpack.c.l.b16 %v534
        %v683 = vunpack.c.h.b16 %v534
        %v684 = vunpack.c.l.b16 %v535
        %v685 = vunpack.c.h.b16 %v535
        %v686 = vunpack.c.l.b16 %v536
        %v687 = vunpack.c.h.b16 %v536
        %v688 = vunpack.c.l.b16 %v537
        %v689 = vunpack.c.h.b16 %v537
        %v690 = vunpack.c.l.b16 %v538
        %v691 = vunpack.c.h.b16 %v538
        %v692 = vunpack.c.l.b16 %v539
        %v693 = vunpack.c.h.b16 %v539
        %v694 = vunpack.c.l.b16 %v540
        %v695 = vunpack.c.h.b16 %v540
        %v696 = vunpack.c.l.b16 %v541
        %v697 = vunpack.c.h.b16 %v541
        %v698 = vunpack.c.l.b16 %v542
        %v699 = vunpack.c.h.b16 %v542
        %v700 = vunpack.c.l.b16 %v543
        %v701 = vunpack.c.h.b16 %v543
        %v702 = vunpack.c.l.b16 %v544
        %v703 = vunpack.c.h.b16 %v544
        %v704 = vunpack.c.l.b16 %v545
        %v705 = vunpack.c.h.b16 %v545
        %v706 = vunpack.c.l.b16 %v546
        %v707 = vunpack.c.h.b16 %v546
        %v708 = vunpack.c.l.b16 %v547
        %v709 = vunpack.c.h.b16 %v547
        %v710 = vunpack.c.l.b16 %v548
        %v711 = vunpack.c.h.b16 %v548
        %v712 = vunpack.c.l.b16 %v549
        %v713 = vunpack.c.h.b16 %v549
        %v714 = vunpack.c.l.b16 %v550
        %v715 = vunpack.c.h.b16 %v550
        %v716 = vunpack.c.l.b16 %v551
        %v717 = vunpack.c.h.b16 %v551
        %v718 = vunpack.c.l.b16 %v552
        %v719 = vunpack.c.h.b16 %v552
        %v720 = vunpack.c.l.b16 %v553
        %v721 = vunpack.c.h.b16 %v553
        %v722 = vunpack.c.l.b16 %v554
        %v723 = vunpack.c.h.b16 %v554
        %v724 = vunpack.c.l.b16 %v555
        %v725 = vunpack.c.h.b16 %v555
        %v726 = vunpack.c.l.b16 %v556
        %v727 = vunpack.c.h.b16 %v556
        %v728 = vunpack.c.l.b16 %v557
        %v729 = vunpack.c.h.b16 %v557
        %v730 = vunpack.c.l.b16 %v558
        %v731 = vunpack.c.h.b16 %v558
        %v732 = vunpack.c.l.b16 %v559
        %v733 = vunpack.c.h.b16 %v559
        %v734 = vunpack.c.l.b16 %v560
        %v735 = vunpack.c.h.b16 %v560
        %v736 = vunpack.c.l.b16 %v561
        %v737 = vunpack.c.h.b16 %v561
        %v738 = vunpack.c.l.b16 %v562
        %v739 = vunpack.c.h.b16 %v562
        %v740 = vunpack.c.l.b16 %v563
        %v741 = vunpack.c.h.b16 %v563
        %v742 = vunpack.c.l.b16 %v564
        %v743 = vunpack.c.h.b16 %v564
        %v744 = vunpack.c.l.b16 %v565
        %v745 = vunpack.c.h.b16 %v565
        %v746 = vunpack.c.l.b16 %v566
        %v747 = vunpack.c.h.b16 %v566
        %v748 = vunpack.c.l.b16 %v567
        %v749 = vunpack.c.h.b16 %v567
        %v750 = vunpack.c.l.b16 %v568
        %v751 = vunpack.c.h.b16 %v568
        %v752 = vunpack.c.l.b16 %v569
        %v753 = vunpack.c.h.b16 %v569
        %v754 = vunpack.c.l.b16 %v570
        %v755 = vunpack.c.h.b16 %v570
        %v756 = vunpack.c.l.b16 %v571
        %v757 = vunpack.c.h.b16 %v571
        %v758 = vunpack.c.l.b16 %v572
        %v759 = vunpack.c.h.b16 %v572
        %v760 = vunpack.c.l.b16 %v573
        %v761 = vunpack.c.h.b16 %v573
        %v762 = vunpack.c.l.b16 %v574
        %v763 = vunpack.c.h.b16 %v574
        %v764 = vunpack.c.l.b16 %v575
        %v765 = vunpack.c.h.b16 %v575
        %v766 = vunpack.c.l.b16 %v576
        %v767 = vunpack.c.h.b16 %v576
        %v768 = vunpack.c.l.b16 %v577
        %v769 = vunpack.c.h.b16 %v577
        %v770 = vunpack.c.l.b16 %v578
        %v771 = vunpack.c.h.b16 %v578
        %v772 = vunpack.c.l.b16 %v579
        %v773 = vunpack.c.h.b16 %v579
        %v774 = vunpack.c.l.b16 %v580
        %v775 = vunpack.c.h.b16 %v580
        %v776 = vunpack.c.l.b16 %v581
        %v777 = vunpack.c.h.b16 %v581
        %v778 = vunpack.c.l.b16 %v582
        %v779 = vunpack.c.h.b16 %v582
        %v780 = vunpack.c.l.b16 %v583
        %v781 = vunpack.c.h.b16 %v583
        %v782 = vunpack.c.l.b16 %v584
        %v783 = vunpack.c.h.b16 %v584
        %v784 = vunpack.c.l.b16 %v585
        %v785 = vunpack.c.h.b16 %v585
        %v786 = vunpack.c.l.b16 %v586
        %v787 = vunpack.c.h.b16 %v586
        %v788 = vunpack.c.l.b16 %v587
        %v789 = vunpack.c.h.b16 %v587
        %v790 = vunpack.c.l.b16 %v588
        %v791 = vunpack.c.h.b16 %v588
        %v792 = vunpack.c.l.b16 %v589
        %v793 = vunpack.c.h.b16 %v589
        %v794 = vpack.c.b16 %v668, %v666
        %v795 = vpack.c.b16 %v669, %v667
        %v796 = vpack.c.b16 %v672, %v670
        %v797 = vpack.c.b16 %v673, %v671
        %v798 = vpack.c.b16 %v676, %v674
        %v799 = vpack.c.b16 %v677, %v675
        %v800 = vpack.c.b16 %v680, %v678
        %v801 = vpack.c.b16 %v681, %v679
        %v802 = vpack.c.b16 %v684, %v682
        %v803 = vpack.c.b16 %v685, %v683
        %v804 = vpack.c.b16 %v688, %v686
        %v805 = vpack.c.b16 %v689, %v687
        %v806 = vpack.c.b16 %v692, %v690
        %v807 = vpack.c.b16 %v693, %v691
        %v808 = vpack.c.b16 %v696, %v694
        %v809 = vpack.c.b16 %v697, %v695
        %v810 = vpack.c.b16 %v700, %v698
        %v811 = vpack.c.b16 %v701, %v699
        %v812 = vpack.c.b16 %v704, %v702
        %v813 = vpack.c.b16 %v705, %v703
        %v814 = vpack.c.b16 %v708, %v706
        %v815 = vpack.c.b16 %v709, %v707
        %v816 = vpack.c.b16 %v712, %v710
        %v817 = vpack.c.b16 %v713, %v711
        %v818 = vpack.c.b16 %v716, %v714
        %v819 = vpack.c.b16 %v717, %v715
        %v820 = vpack.c.b16 %v720, %v718
        %v821 = vpack.c.b16 %v721, %v719
        %v822 = vpack.c.b16 %v724, %v722
        %v823 = vpack.c.b16 %v725, %v723
        %v824 = vpack.c.b16 %v728, %v726
        %v825 = vpack.c.b16 %v729, %v727
        %v826 = vpack.c.b16 %v732, %v730
        %v827 = vpack.c.b16 %v733, %v731
        %v828 = vpack.c.b16 %v736, %v734
        %v829 = vpack.c.b16 %v737, %v735
        %v830 = vpack.c.b16 %v740, %v738
        %v831 = vpack.c.b16 %v741, %v739
        %v832 = vpack.c.b16 %v744, %v742
        %v833 = vpack.c.b16 %v745, %v743
        %v834 = vpack.c.b16 %v748, %v746
        %v835 = vpack.c.b16 %v749, %v747
        %v836 = vpack.c.b16 %v752, %v750
        %v837 = vpack.c.b16 %v753, %v751
        %v838 = vpack.c.b16 %v756, %v754
        %v839 = vpack.c.b16 %v757, %v755
        %v840 = vpack.c.b16 %v760, %v758
        %v841 = vpack.c.b16 %v761, %v759
        %v842 = vpack.c.b16 %v764, %v762
        %v843 = vpack.c.b16 %v765, %v763
        %v844 = vpack.c.b16 %v768, %v766
        %v845 = vpack.c.b16 %v769, %v767
        %v846 = vpack.c.b16 %v772, %v770
        %v847 = vpack.c.b16 %v773, %v771
        %v848 = vpack.c.b16 %v776, %v774
        %v849 = vpack.c.b16 %v777, %v775
        %v850 = vpack.c.b16 %v780, %v778
        %v851 = vpack.c.b16 %v781, %v779
        %v852 = vpack.c.b16 %v784, %v782
        %v853 = vpack.c.b16 %v785, %v783
        %v854 = vpack.c.b16 %v788, %v786
        %v855 = vpack.c.b16 %v789, %v787
        %v856 = vpack.c.b16 %v792, %v790
        %v857 = vpack.c.b16 %v793, %v791
        %922 = vmatprep.subr.bf16.mxu0 %v795
        %923 = vmatpush1.bf16.msra.mxu0 %v794
        %924 = vmatprep.subr.bf16.mxu0 %v797
        %925 = vmatpush1.bf16.msra.mxu0 %v796
        %926 = vmatprep.subr.bf16.mxu0 %v799
        %927 = vmatpush1.bf16.msra.mxu0 %v798
        %928 = vmatprep.subr.bf16.mxu0 %v801
        %929 = vmatpush1.bf16.msra.mxu0 %v800
        %930 = vmatprep.subr.bf16.mxu0 %v803
        %931 = vmatpush1.bf16.msra.mxu0 %v802
        %932 = vmatprep.subr.bf16.mxu0 %v805
        %933 = vmatpush1.bf16.msra.mxu0 %v804
        %934 = vmatprep.subr.bf16.mxu0 %v807
        %935 = vmatpush1.bf16.msra.mxu0 %v806
        %936 = vmatprep.subr.bf16.mxu0 %v809
        %937 = vmatpush1.bf16.msra.mxu0 %v808
        %938 = vmatprep.subr.bf16.mxu0 %v811
        %939 = vmatpush1.bf16.msra.mxu0 %v810
        %940 = vmatprep.subr.bf16.mxu0 %v813
        %941 = vmatpush1.bf16.msra.mxu0 %v812
        %942 = vmatprep.subr.bf16.mxu0 %v815
        %943 = vmatpush1.bf16.msra.mxu0 %v814
        %944 = vmatprep.subr.bf16.mxu0 %v817
        %945 = vmatpush1.bf16.msra.mxu0 %v816
        %946 = vmatprep.subr.bf16.mxu0 %v819
        %947 = vmatpush1.bf16.msra.mxu0 %v818
        %948 = vmatprep.subr.bf16.mxu0 %v821
        %949 = vmatpush1.bf16.msra.mxu0 %v820
        %950 = vmatprep.subr.bf16.mxu0 %v823
        %951 = vmatpush1.bf16.msra.mxu0 %v822
        %952 = vmatprep.subr.bf16.mxu0 %v825
        %953 = vmatpush1.bf16.msra.mxu0 %v824
        %954 = vmatprep.mubr.bf16.mxu0 %v523
        %955 = vmatmul.mubr.bf16.gmra.mrb[0].mxu0 %v522
        %v956 = vpop.f32.mrb[0].mxu0
        %v957 = vadd.f32 %v595, %v956
        %v958 = vpop.f32.mrb[0].mxu0
        %v959 = vadd.f32 %v599, %v958
        %v960 = vpop.f32.mrb[0].mxu0
        %v961 = vpop.f32.mrb[0].mxu0
        %962 = vdwg.mxu0
        %963 = vmatprep.subr.bf16.mxu0 %v827
        %964 = vmatpush1.bf16.msra.mxu0 %v826
        %965 = vmatprep.subr.bf16.mxu0 %v829
        %966 = vmatpush1.bf16.msra.mxu0 %v828
        %967 = vmatprep.subr.bf16.mxu0 %v831
        %968 = vmatpush1.bf16.msra.mxu0 %v830
        %969 = vmatprep.subr.bf16.mxu0 %v833
        %970 = vmatpush1.bf16.msra.mxu0 %v832
        %971 = vmatprep.subr.bf16.mxu0 %v835
        %972 = vmatpush1.bf16.msra.mxu0 %v834
        %973 = vmatprep.subr.bf16.mxu0 %v837
        %974 = vmatpush1.bf16.msra.mxu0 %v836
        %975 = vmatprep.subr.bf16.mxu0 %v839
        %976 = vmatpush1.bf16.msra.mxu0 %v838
        %977 = vmatprep.subr.bf16.mxu0 %v841
        %978 = vmatpush1.bf16.msra.mxu0 %v840
        %979 = vmatprep.subr.bf16.mxu0 %v843
        %980 = vmatpush1.bf16.msra.mxu0 %v842
        %981 = vmatprep.subr.bf16.mxu0 %v845
        %982 = vmatpush1.bf16.msra.mxu0 %v844
        %983 = vmatprep.subr.bf16.mxu0 %v847
        %984 = vmatpush1.bf16.msra.mxu0 %v846
        %985 = vmatprep.subr.bf16.mxu0 %v849
        %986 = vmatpush1.bf16.msra.mxu0 %v848
        %987 = vmatprep.subr.bf16.mxu0 %v851
        %988 = vmatpush1.bf16.msra.mxu0 %v850
        %989 = vmatprep.subr.bf16.mxu0 %v853
        %990 = vmatpush1.bf16.msra.mxu0 %v852
        %991 = vmatprep.subr.bf16.mxu0 %v855
        %992 = vmatpush1.bf16.msra.mxu0 %v854
        %993 = vmatprep.subr.bf16.mxu0 %v857
        %994 = vmatpush1.bf16.msra.mxu0 %v856
        %995 = vmatprep.mubr.bf16.mxu0 %v525
        %996 = vmatmul.mubr.bf16.gmra.mrb[0].mxu0 %v524
        %v997 = vpop.f32.mrb[0].mxu0
        %v998 = vadd.f32 %v957, %v997
        %v999 = vpop.f32.mrb[0].mxu0
        %v1000 = vadd.f32 %v959, %v999
        %v1001 = vpop.f32.mrb[0].mxu0
        %v1002 = vpop.f32.mrb[0].mxu0
        %1003 = vdwg.mxu0
        %v1004 = vmax.f32 %v998, 0.0
        %v1005 = vmax.f32 %v1000, 0.0
        %v1006 = vpack.c.bf16 %v1004, %v1004
        %v1007 = vpack.c.bf16 %v1005, %v1005
        %v1008 = vld [vmem:[%s5] sm:$0xf]
        %v1009 = vld [vmem:[%s5 + $0x4] sm:$0xf]
        %v1010 = vld [vmem:[%s5 + $0x8] sm:$0xf]
        %v1011 = vld [vmem:[%s5 + $0xc] sm:$0xf]
        %v1012 = vld [vmem:[%s5 + $0x10] sm:$0xf]
        %v1013 = vld [vmem:[%s5 + $0x14] sm:$0xf]
        %v1014 = vld [vmem:[%s5 + $0x18] sm:$0xf]
        %v1015 = vld [vmem:[%s5 + $0x1c] sm:$0xf]
        %v1016 = vld [vmem:[%s5 + $0x20] sm:$0xf]
        %v1017 = vld [vmem:[%s5 + $0x24] sm:$0xf]
        %v1018 = vld [vmem:[%s5 + $0x28] sm:$0xf]
        %v1019 = vld [vmem:[%s5 + $0x2c] sm:$0xf]
        %v1020 = vld [vmem:[%s5 + $0x30] sm:$0xf]
        %v1021 = vld [vmem:[%s5 + $0x34] sm:$0xf]
        %v1022 = vld [vmem:[%s5 + $0x38] sm:$0xf]
        %v1023 = vld [vmem:[%s5 + $0x3c] sm:$0xf]
        %v1024 = vld [vmem:[%s5 + $0x40] sm:$0xf]
        %v1025 = vld [vmem:[%s5 + $0x44] sm:$0xf]
        %v1026 = vld [vmem:[%s5 + $0x48] sm:$0xf]
        %v1027 = vld [vmem:[%s5 + $0x4c] sm:$0xf]
        %v1028 = vld [vmem:[%s5 + $0x50] sm:$0xf]
        %v1029 = vld [vmem:[%s5 + $0x54] sm:$0xf]
        %v1030 = vld [vmem:[%s5 + $0x58] sm:$0xf]
        %v1031 = vld [vmem:[%s5 + $0x5c] sm:$0xf]
        %v1032 = vld [vmem:[%s5 + $0x60] sm:$0xf]
        %v1033 = vld [vmem:[%s5 + $0x64] sm:$0xf]
        %v1034 = vld [vmem:[%s5 + $0x68] sm:$0xf]
        %v1035 = vld [vmem:[%s5 + $0x6c] sm:$0xf]
        %v1036 = vld [vmem:[%s5 + $0x70] sm:$0xf]
        %v1037 = vld [vmem:[%s5 + $0x74] sm:$0xf]
        %v1038 = vld [vmem:[%s5 + $0x78] sm:$0xf]
        %v1039 = vld [vmem:[%s5 + $0x7c] sm:$0xf]
        %v1040 = vld [vmem:[%s6] sm:$0x1]
        %v1042 = vlaneseq
        %v1043 = vshrl.u32 %v1042, 7
        %v1044 = vsub.s32 0, %v1043
        %v1045 = vrot.slane %v1040, %v1044
        %v1079 = vunpack.c.l.b16 %v1008
        %v1080 = vunpack.c.l.b16 %v1009
        %v1081 = vunpack.c.l.b16 %v1010
        %v1082 = vunpack.c.l.b16 %v1011
        %v1083 = vunpack.c.l.b16 %v1012
        %v1084 = vunpack.c.l.b16 %v1013
        %v1085 = vunpack.c.l.b16 %v1014
        %v1086 = vunpack.c.l.b16 %v1015
        %v1087 = vunpack.c.l.b16 %v1016
        %v1088 = vunpack.c.l.b16 %v1017
        %v1089 = vunpack.c.l.b16 %v1018
        %v1090 = vunpack.c.l.b16 %v1019
        %v1091 = vunpack.c.l.b16 %v1020
        %v1092 = vunpack.c.l.b16 %v1021
        %v1093 = vunpack.c.l.b16 %v1022
        %v1094 = vunpack.c.l.b16 %v1023
        %v1095 = vunpack.c.l.b16 %v1024
        %v1096 = vunpack.c.l.b16 %v1025
        %v1097 = vunpack.c.l.b16 %v1026
        %v1098 = vunpack.c.l.b16 %v1027
        %v1099 = vunpack.c.l.b16 %v1028
        %v1100 = vunpack.c.l.b16 %v1029
        %v1101 = vunpack.c.l.b16 %v1030
        %v1102 = vunpack.c.l.b16 %v1031
        %v1103 = vunpack.c.l.b16 %v1032
        %v1104 = vunpack.c.l.b16 %v1033
        %v1105 = vunpack.c.l.b16 %v1034
        %v1106 = vunpack.c.l.b16 %v1035
        %v1107 = vunpack.c.l.b16 %v1036
        %v1108 = vunpack.c.l.b16 %v1037
        %v1109 = vunpack.c.l.b16 %v1038
        %v1110 = vunpack.c.l.b16 %v1039
        %v1111 = vpack.c.b16 %v1080, %v1079
        %v1112 = vpack.c.b16 %v1082, %v1081
        %v1113 = vpack.c.b16 %v1084, %v1083
        %v1114 = vpack.c.b16 %v1086, %v1085
        %v1115 = vpack.c.b16 %v1088, %v1087
        %v1116 = vpack.c.b16 %v1090, %v1089
        %v1117 = vpack.c.b16 %v1092, %v1091
        %v1118 = vpack.c.b16 %v1094, %v1093
        %v1119 = vpack.c.b16 %v1096, %v1095
        %v1120 = vpack.c.b16 %v1098, %v1097
        %v1121 = vpack.c.b16 %v1100, %v1099
        %v1122 = vpack.c.b16 %v1102, %v1101
        %v1123 = vpack.c.b16 %v1104, %v1103
        %v1124 = vpack.c.b16 %v1106, %v1105
        %v1125 = vpack.c.b16 %v1108, %v1107
        %v1126 = vpack.c.b16 %v1110, %v1109
        %1143 = vmatprep.subr.bf16.mxu0 0
        %1144 = vmatpush1.bf16.msra.mxu0 %v1111
        %1145 = vmatprep.subr.bf16.mxu0 0
        %1146 = vmatpush1.bf16.msra.mxu0 %v1112
        %1147 = vmatprep.subr.bf16.mxu0 0
        %1148 = vmatpush1.bf16.msra.mxu0 %v1113
        %1149 = vmatprep.subr.bf16.mxu0 0
        %1150 = vmatpush1.bf16.msra.mxu0 %v1114
        %1151 = vmatprep.subr.bf16.mxu0 0
        %1152 = vmatpush1.bf16.msra.mxu0 %v1115
        %1153 = vmatprep.subr.bf16.mxu0 0
        %1154 = vmatpush1.bf16.msra.mxu0 %v1116
        %1155 = vmatprep.subr.bf16.mxu0 0
        %1156 = vmatpush1.bf16.msra.mxu0 %v1117
        %1157 = vmatprep.subr.bf16.mxu0 0
        %1158 = vmatpush1.bf16.msra.mxu0 %v1118
        %1159 = vmatprep.subr.bf16.mxu0 0
        %1160 = vmatpush1.bf16.msra.mxu0 %v1119
        %1161 = vmatprep.subr.bf16.mxu0 0
        %1162 = vmatpush1.bf16.msra.mxu0 %v1120
        %1163 = vmatprep.subr.bf16.mxu0 0
        %1164 = vmatpush1.bf16.msra.mxu0 %v1121
        %1165 = vmatprep.subr.bf16.mxu0 0
        %1166 = vmatpush1.bf16.msra.mxu0 %v1122
        %1167 = vmatprep.subr.bf16.mxu0 0
        %1168 = vmatpush1.bf16.msra.mxu0 %v1123
        %1169 = vmatprep.subr.bf16.mxu0 0
        %1170 = vmatpush1.bf16.msra.mxu0 %v1124
        %1171 = vmatprep.subr.bf16.mxu0 0
        %1172 = vmatpush1.bf16.msra.mxu0 %v1125
        %1173 = vmatprep.subr.bf16.mxu0 0
        %1174 = vmatpush1.bf16.msra.mxu0 %v1126
        %1175 = vmatprep.mubr.bf16.mxu0 %v1007
        %1176 = vmatmul.mubr.bf16.gmra.mrb[0].mxu0 %v1006
        %v1177 = vpop.f32.mrb[0].mxu0
        %v1178 = vadd.f32 %v1045, %v1177
        %v1179 = vpop.f32.mrb[0].mxu0
        %v1180 = vpop.f32.mrb[0].mxu0
        %v1181 = vpop.f32.mrb[0].mxu0
        %1182 = vdwg.mxu0
        %v1183 = vmax.f32 %v1178, 0.0
        %1184 = vxpose.xlu0.b32.start [1/16] %v1183, 128
        %1185 = vxpose.xlu0.b32.cont [2/16] 0.0, 128
        %1186 = vxpose.xlu0.b32.cont [3/16] 0.0, 128
        %1187 = vxpose.xlu0.b32.cont [4/16] 0.0, 128
        %1188 = vxpose.xlu0.b32.cont [5/16] 0.0, 128
        %1189 = vxpose.xlu0.b32.cont [6/16] 0.0, 128
        %1190 = vxpose.xlu0.b32.cont [7/16] 0.0, 128
        %1191 = vxpose.xlu0.b32.cont [8/16] 0.0, 128
        %1192 = vxpose.xlu0.b32.cont [9/16] 0.0, 128
        %1193 = vxpose.xlu0.b32.cont [10/16] 0.0, 128
        %1194 = vxpose.xlu0.b32.cont [11/16] 0.0, 128
        %1195 = vxpose.xlu0.b32.cont [12/16] 0.0, 128
        %1196 = vxpose.xlu0.b32.cont [13/16] 0.0, 128
        %1197 = vxpose.xlu0.b32.cont [14/16] 0.0, 128
        %1198 = vxpose.xlu0.b32.cont [15/16] 0.0, 128
        %1199 = vxpose.xlu0.b32.end [16/16] 0.0, 128
        %v1200 = vpop.trf.xlu0
        %v1201 = vpop.trf.xlu0
        %v1202 = vpop.trf.xlu0
        %v1203 = vpop.trf.xlu0
        %v1204 = vpop.trf.xlu0
        %v1205 = vpop.trf.xlu0
        %v1206 = vpop.trf.xlu0
        %v1207 = vpop.trf.xlu0
        %v1208 = vpop.trf.xlu0
        %v1209 = vpop.trf.xlu0
        %v1210 = vpop.trf.xlu0
        %v1211 = vpop.trf.xlu0
        %v1212 = vpop.trf.xlu0
        %v1213 = vpop.trf.xlu0
        %v1214 = vpop.trf.xlu0
        %v1215 = vpop.trf.xlu0
        %v1216 = vld [vmem:[%s7] sm:$0xff]
        %v1217 = vld [vmem:[%s7 + $0x8] sm:$0xff]
        %v1218 = vld [vmem:[%s7 + $0x10] sm:$0xff]
        %v1219 = vld [vmem:[%s7 + $0x18] sm:$0xff]
        %v1220 = vld [vmem:[%s7 + $0x20] sm:$0xff]
        %v1221 = vld [vmem:[%s7 + $0x28] sm:$0xff]
        %v1222 = vld [vmem:[%s7 + $0x30] sm:$0xff]
        %v1223 = vld [vmem:[%s7 + $0x38] sm:$0xff]
        %v1224 = vld [vmem:[%s7 + $0x40] sm:$0xff]
        %v1225 = vld [vmem:[%s7 + $0x48] sm:$0xff]
        %v1226 = vld [vmem:[%s7 + $0x50] sm:$0xff]
        %v1227 = vld [vmem:[%s7 + $0x58] sm:$0xff]
        %v1228 = vld [vmem:[%s7 + $0x60] sm:$0xff]
        %v1229 = vld [vmem:[%s7 + $0x68] sm:$0xff]
        %v1230 = vld [vmem:[%s7 + $0x70] sm:$0xff]
        %v1231 = vld [vmem:[%s7 + $0x78] sm:$0xff]
        %1233 = vset.pattern.permute.xlu0 0
        %1234 = vperm.xlu0 %1233, %v1216
        %v1235 = vpop.permute.xlu0 %1234
        %1238 = vset.pattern.permute.xlu0 0
        %1239 = vperm.xlu0 %1238, %v1217
        %v1240 = vpop.permute.xlu0 %1239
        %1243 = vset.pattern.permute.xlu0 0
        %1244 = vperm.xlu0 %1243, %v1218
        %v1245 = vpop.permute.xlu0 %1244
        %1248 = vset.pattern.permute.xlu0 0
        %1249 = vperm.xlu0 %1248, %v1219
        %v1250 = vpop.permute.xlu0 %1249
        %1253 = vset.pattern.permute.xlu0 0
        %1254 = vperm.xlu0 %1253, %v1220
        %v1255 = vpop.permute.xlu0 %1254
        %1258 = vset.pattern.permute.xlu0 0
        %1259 = vperm.xlu0 %1258, %v1221
        %v1260 = vpop.permute.xlu0 %1259
        %1263 = vset.pattern.permute.xlu0 0
        %1264 = vperm.xlu0 %1263, %v1222
        %v1265 = vpop.permute.xlu0 %1264
        %1268 = vset.pattern.permute.xlu0 0
        %1269 = vperm.xlu0 %1268, %v1223
        %v1270 = vpop.permute.xlu0 %1269
        %1273 = vset.pattern.permute.xlu0 0
        %1274 = vperm.xlu0 %1273, %v1224
        %v1275 = vpop.permute.xlu0 %1274
        %1278 = vset.pattern.permute.xlu0 0
        %1279 = vperm.xlu0 %1278, %v1225
        %v1280 = vpop.permute.xlu0 %1279
        %1283 = vset.pattern.permute.xlu0 0
        %1284 = vperm.xlu0 %1283, %v1226
        %v1285 = vpop.permute.xlu0 %1284
        %1288 = vset.pattern.permute.xlu0 0
        %1289 = vperm.xlu0 %1288, %v1227
        %v1290 = vpop.permute.xlu0 %1289
        %1293 = vset.pattern.permute.xlu0 0
        %1294 = vperm.xlu0 %1293, %v1228
        %v1295 = vpop.permute.xlu0 %1294
        %1298 = vset.pattern.permute.xlu0 0
        %1299 = vperm.xlu0 %1298, %v1229
        %v1300 = vpop.permute.xlu0 %1299
        %1303 = vset.pattern.permute.xlu0 0
        %1304 = vperm.xlu0 %1303, %v1230
        %v1305 = vpop.permute.xlu0 %1304
        %1308 = vset.pattern.permute.xlu0 0
        %1309 = vperm.xlu0 %1308, %v1231
        %v1310 = vpop.permute.xlu0 %1309
        %v1312 = vmul.f32 %v1200, %v1235
        %v1313 = vmul.f32 %v1201, %v1240
        %v1314 = vmul.f32 %v1202, %v1245
        %v1315 = vmul.f32 %v1203, %v1250
        %v1316 = vmul.f32 %v1204, %v1255
        %v1317 = vmul.f32 %v1205, %v1260
        %v1318 = vmul.f32 %v1206, %v1265
        %v1319 = vmul.f32 %v1207, %v1270
        %v1320 = vmul.f32 %v1208, %v1275
        %v1321 = vmul.f32 %v1209, %v1280
        %v1322 = vmul.f32 %v1210, %v1285
        %v1323 = vmul.f32 %v1211, %v1290
        %v1324 = vmul.f32 %v1212, %v1295
        %v1325 = vmul.f32 %v1213, %v1300
        %v1326 = vmul.f32 %v1214, %v1305
        %v1327 = vmul.f32 %v1215, %v1310
        %vm1328 = vcmask 64512
        %v1329 = vsel %vm1328, %v1312, 0.0
        %v1330 = vsel %vm1328, %v1313, 0.0
        %v1331 = vadd.f32 %v1329, %v1330
        %v1332 = vsel %vm1328, %v1314, 0.0
        %v1333 = vadd.f32 %v1331, %v1332
        %v1334 = vsel %vm1328, %v1315, 0.0
        %v1335 = vadd.f32 %v1333, %v1334
        %v1336 = vsel %vm1328, %v1316, 0.0
        %v1337 = vadd.f32 %v1335, %v1336
        %v1338 = vsel %vm1328, %v1317, 0.0
        %v1339 = vadd.f32 %v1337, %v1338
        %v1340 = vsel %vm1328, %v1318, 0.0
        %v1341 = vadd.f32 %v1339, %v1340
        %v1342 = vsel %vm1328, %v1319, 0.0
        %v1343 = vadd.f32 %v1341, %v1342
        %v1344 = vsel %vm1328, %v1320, 0.0
        %v1345 = vadd.f32 %v1343, %v1344
        %v1346 = vsel %vm1328, %v1321, 0.0
        %v1347 = vadd.f32 %v1345, %v1346
        %v1348 = vsel %vm1328, %v1322, 0.0
        %v1349 = vadd.f32 %v1347, %v1348
        %v1350 = vsel %vm1328, %v1323, 0.0
        %v1351 = vadd.f32 %v1349, %v1350
        %v1352 = vsel %vm1328, %v1324, 0.0
        %v1353 = vadd.f32 %v1351, %v1352
        %v1354 = vsel %vm1328, %v1325, 0.0
        %v1355 = vadd.f32 %v1353, %v1354
        %v1356 = vsel %vm1328, %v1326, 0.0
        %v1357 = vadd.f32 %v1355, %v1356
        %v1358 = vsel %vm1328, %v1327, 0.0
        %v1359 = vadd.f32 %v1357, %v1358
        %v1360 = vrot.slane %v1359, 4
        %v1361 = vadd.f32 %v1359, %v1360
        %v1362 = vrot.slane %v1361, 2
        %v1363 = vadd.f32 %v1361, %v1362
        %v1364 = vrot.slane %v1363, 1
        %v1365 = vadd.f32 %v1363, %v1364
        %v1366 = vld [vmem:[#allocation2] sm:$0x1]
        %1368 = vset.pattern.permute.xlu0 0
        %1369 = vperm.xlu0 %1368, %v1366
        %v1370 = vpop.permute.xlu0 %1369
        %v1372 = vlaneseq
        %v1373 = vshrl.u32 %v1372, 7
        %v1374 = vsub.s32 0, %v1373
        %v1375 = vrot.slane %v1370, %v1374
        %v1376 = vadd.f32 %v1365, %v1375
        %vm1377 = vcmask 57344
        %1378 = vst.msk [vmem:[%s354] sm:$0x1] %vm1377, %v1376
        %s1379 = sand.u32 %s229, 1
        %s1380 = scalar_lea.sflag [#allocation5], %s1379
        %s1381 = sand.u32 %s229, 1
        %s1382 = scalar_lea.vmem [#allocation8], %s1381
        // Predicated region
        $region65: #{tpu_custom_call.1} parent=55 // pred_check
          %p1383 = pneg %p239
        $region66: #{tpu_custom_call.1} parent=55 // pred_check_branch
          %1385 = sbr.rel (%p1383) target = $region68
        $region67: #{tpu_custom_call.1} parent=55 // pred_region
          %s1387 = ssub.s32 16, 16
          %1388 = vsyncadd %s1380, %s1387
          %s1389 = smul.addr %s27, 16
          %s1390 = scalar_lea.hbm %s9, %s1389
          %s1392 = sshll.u32 %s1382, 4
          %s1393 = int_to_ptr.vmem [resolvable:$true] %s1392
          %1395 = dma.vmem_to_hbm [thread:$0]  %s1393, 16, %s1390, %s1380
        $region68: #{tpu_custom_call.1} parent=55 // pred_fallthru
          _
      $region56: #{tpu_custom_call.1} parent=5 // pred_fallthru
        _
      %p1396 = scmp.le.s32.totalorder 2, %s22
      // Predicated region
      $region69: #{tpu_custom_call.1} parent=5 // pred_check
        %p1397 = pneg %p1396
      $region70: #{tpu_custom_call.1} parent=5 // pred_check_branch
        %1399 = sbr.rel (%p1397) target = $region72
      $region71: #{tpu_custom_call.1} parent=5 // pred_region
        %s1400 = ssub.s32 %s22, 2
        // Predicated region
        $region73: #{tpu_custom_call.1} parent=71 // pred_check
          %p1401 = pneg %p245
        $region74: #{tpu_custom_call.1} parent=71 // pred_check_branch
          %1403 = sbr.rel (%p1401) target = $region76
        $region75: #{tpu_custom_call.1} parent=71 // pred_region
          %s1404 = sand.u32 %s230, 1
          %s1405 = scalar_lea.sflag [#allocation5], %s1404
          %s1406 = sand.u32 %s230, 1
          %s1407 = scalar_lea.vmem [#allocation8], %s1406
          %1408 = dma.done %s1405, 16
        $region76: #{tpu_custom_call.1} parent=71 // pred_fallthru
          _
      $region72: #{tpu_custom_call.1} parent=5 // pred_fallthru
        _
    $region6: #{tpu_custom_call.1} parent=1 // loop_footer
      %s26 = sadd.s32 1, %s22
    $region7: #{tpu_custom_call.1} parent=1 // loop_footer_branch
      %21 = sbr.rel target = $region3
    $region8: #{tpu_custom_call.1} parent=1 // loop_exit
      _
    %1409 = vsyncpa [#allocation4], 1
    %s1410 = scalar_lea.sflag [#allocation4], 1
    %1411 = vsyncpa %s1410, 1
    %1412 = vsyncpa [#allocation7], 1
    %1413 = vsyncpa [#allocation5], 1
    %s1414 = scalar_lea.sflag [#allocation5], 1
    %1415 = vsyncpa %s1414, 1

</llo_original>
